<compile_context>
chip_gen: v6e
topology: v6e:2x2x1
jax: 0.10.0
libtpu: 0.0.40
codegen_flags: <defaults>
</compile_context>

<pallas_src>
import functools

import jax
import jax.numpy as jnp
from jax import lax
from jax.experimental import pallas as pl
from jax.experimental.pallas import tpu as pltpu


# ---------------------------------------------------------------------------
# Model configuration (defaults of Restormer_FDKN)
# ---------------------------------------------------------------------------
CHANNELS = (48, 96, 192, 384)
NUM_BLOCKS = (4, 6, 6, 8)
NUM_HEADS = (1, 2, 4, 8)
EXPANSION = 2.66
IN_CHANS = 1

# Safe scoped-VMEM budget on v5e/v6e (128 MiB physical) and v7x (64 MiB).
VMEM_LIMIT = 32 * 1024 * 1024


def _round_up(x, m):
    return (x + m - 1) // m * m


# ---------------------------------------------------------------------------
# Pallas kernel 1: row/col-tiled matmul (all plain 1x1 convs + im2col'ed 3x3)
# ---------------------------------------------------------------------------
def _matmul_kernel(x_ref, w_ref, o_ref):
    # x_ref: (TM, K) bf16 | w_ref: (K, TN) bf16 | o_ref: (TM, TN)
    o_ref[...] = jnp.dot(
        x_ref[...], w_ref[...], preferred_element_type=jnp.float32
    ).astype(o_ref.dtype)


def matmul_pallas(x, w, out_dtype=jnp.float32, tm=256):
    """(M, K) @ (K, N).  bf16 MXU feed, f32 accumulation; M tiled (and N tiled
    when 128-aligned) so the grid software-pipelines and multi-TC chips can
    shard the parallel axes."""
    M, K = x.shape
    _, N = w.shape
    TM = min(tm, _round_up(M, 8))
    M_pad = _round_up(M, TM)
    if N % 256 == 0:
        TN = 256
    elif N % 128 == 0:
        TN = 128
    else:
        TN = N
    xb = x.astype(jnp.bfloat16)
    if M_pad != M:
        xb = jnp.pad(xb, ((0, M_pad - M), (0, 0)))
    wb = w.astype(jnp.bfloat16)
    y = pl.pallas_call(
        _matmul_kernel,
        out_shape=jax.ShapeDtypeStruct((M_pad, N), out_dtype),
        grid_spec=pltpu.PrefetchScalarGridSpec(
            num_scalar_prefetch=0,
            grid=(M_pad // TM, N // TN),
            in_specs=[
                pl.BlockSpec((TM, K), lambda i, j: (i, 0)),
                pl.BlockSpec((K, TN), lambda i, j: (0, j)),
            ],
            out_specs=pl.BlockSpec((TM, TN), lambda i, j: (i, j)),
        ),
        compiler_params=pltpu.CompilerParams(
            dimension_semantics=("parallel", "parallel"),
            vmem_limit_bytes=VMEM_LIMIT,
        ),
    )(xb, wb)
    return y if M_pad == M else y[:M]


def conv1x1_pallas(x_nhwc, w_oi11, out_dtype=jnp.float32):
    """Pointwise conv: (B,H,W,Cin) x (Cout,Cin,1,1) -> (B,H,W,Cout)."""
    B, H, W, Cin = x_nhwc.shape
    Cout = w_oi11.shape[0]
    wt = jnp.transpose(w_oi11.reshape(Cout, Cin), (1, 0))        # (Cin, Cout)
    y = matmul_pallas(x_nhwc.reshape(B * H * W, Cin), wt, out_dtype=out_dtype)
    return y.reshape(B, H, W, Cout)


def conv3x3_pallas(x_nhwc, w_oihw, out_dtype=jnp.float32):
    """Dense 3x3 conv, stride 1, pad 1: bf16 im2col in the wrapper, then one
    fused (B*H*W, 9*Cin) @ (9*Cin, Cout) MXU matmul."""
    B, H, W, Cin = x_nhwc.shape
    Cout = w_oihw.shape[0]
    xp = jnp.pad(x_nhwc.astype(jnp.bfloat16), ((0, 0), (1, 1), (1, 1), (0, 0)))
    taps = [xp[:, ky:ky + H, kx:kx + W, :]
            for ky in range(3) for kx in range(3)]
    patches = jnp.concatenate(taps, axis=-1).reshape(B * H * W, 9 * Cin)
    w = jnp.transpose(w_oihw, (2, 3, 1, 0)).reshape(9 * Cin, Cout)
    y = matmul_pallas(patches, w, out_dtype=out_dtype)
    return y.reshape(B, H, W, Cout)


# ---------------------------------------------------------------------------
# Pallas kernel 2: fused LayerNorm -> 1x1-conv matmul (qkv / ffn_in)
# ---------------------------------------------------------------------------
def _ln_matmul_kernel(x_ref, g_ref, b_ref, w_ref, o_ref):
    # x_ref: (TM, C) f32 | g/b: (1, C) f32 | w_ref: (C, N) bf16
    x = x_ref[...]
    mu = jnp.mean(x, axis=-1, keepdims=True)
    xc = x - mu
    var = jnp.mean(xc * xc, axis=-1, keepdims=True)
    xn = (xc * lax.rsqrt(var + 1e-5)) * g_ref[0] + b_ref[0]
    o_ref[...] = jnp.dot(
        xn.astype(jnp.bfloat16), w_ref[...], preferred_element_type=jnp.float32
    ).astype(o_ref.dtype)


def ln_matmul_pallas(x, gamma, beta, w, out_dtype=jnp.bfloat16, tm=256):
    """Per-pixel LayerNorm (eps 1e-5, like nn.LayerNorm) fused into the
    following 1x1-conv matmul: one HBM round-trip instead of two."""
    M, C = x.shape
    _, N = w.shape
    TM = min(tm, _round_up(M, 8))
    M_pad = _round_up(M, TM)
    xp = x.astype(jnp.float32)
    if M_pad != M:
        xp = jnp.pad(xp, ((0, M_pad - M), (0, 0)))
    y = pl.pallas_call(
        _ln_matmul_kernel,
        out_shape=jax.ShapeDtypeStruct((M_pad, N), out_dtype),
        grid_spec=pltpu.PrefetchScalarGridSpec(
            num_scalar_prefetch=0,
            grid=(M_pad // TM,),
            in_specs=[
                pl.BlockSpec((TM, C), lambda i: (i, 0)),
                pl.BlockSpec((1, C), lambda i: (0, 0)),
                pl.BlockSpec((1, C), lambda i: (0, 0)),
                pl.BlockSpec((C, N), lambda i: (0, 0)),
            ],
            out_specs=pl.BlockSpec((TM, N), lambda i: (i, 0)),
        ),
        compiler_params=pltpu.CompilerParams(
            dimension_semantics=("parallel",),
            vmem_limit_bytes=VMEM_LIMIT,
        ),
    )(xp, gamma.reshape(1, C).astype(jnp.float32),
      beta.reshape(1, C).astype(jnp.float32), w.astype(jnp.bfloat16))
    return y if M_pad == M else y[:M]


# ---------------------------------------------------------------------------
# Pallas kernel 3: fused GELU gate -> ffn_out matmul (GDFN tail)
# ---------------------------------------------------------------------------
def _erf(x):
    # Abramowitz & Stegun 7.1.26 (|err| <= 1.5e-7); uses only exp (EUP slot),
    # so exact-GELU semantics are kept without relying on an erf lowering.
    a1, a2, a3, a4, a5 = (0.254829592, -0.284496736, 1.421413741,
                          -1.453152027, 1.061405429)
    p = 0.3275911
    sgn = jnp.where(x < 0.0, -1.0, 1.0)
    ax = jnp.abs(x)
    t = 1.0 / (1.0 + p * ax)
    poly = ((((a5 * t + a4) * t + a3) * t + a2) * t + a1) * t
    return sgn * (1.0 - poly * jnp.exp(-ax * ax))


def _gate_matmul_kernel(y_ref, w_ref, o_ref, *, hid):
    # y_ref: (TM, 2*hid) bf16 | w_ref: (hid, N) bf16 | o_ref: (TM, N)
    y = y_ref[...]
    x1 = y[:, :hid].astype(jnp.float32)
    x2 = y[:, hid:].astype(jnp.float32)
    g = 0.5 * x1 * (1.0 + _erf(x1 * 0.7071067811865476)) * x2   # exact GELU gate
    o_ref[...] = jnp.dot(
        g.astype(jnp.bfloat16), w_ref[...], preferred_element_type=jnp.float32
    ).astype(o_ref.dtype)


def gate_matmul_pallas(y, w, out_dtype=jnp.float32, tm=256):
    """GDFN gate  GELU(x1) * x2  fused into the project_out matmul."""
    M, K2 = y.shape
    hid, N = w.shape
    assert K2 == 2 * hid
    TM = min(tm, _round_up(M, 8))
    M_pad = _round_up(M, TM)
    yb = y.astype(jnp.bfloat16)
    if M_pad != M:
        yb = jnp.pad(yb, ((0, M_pad - M), (0, 0)))
    out = pl.pallas_call(
        functools.partial(_gate_matmul_kernel, hid=hid),
        out_shape=jax.ShapeDtypeStruct((M_pad, N), out_dtype),
        grid_spec=pltpu.PrefetchScalarGridSpec(
            num_scalar_prefetch=0,
            grid=(M_pad // TM,),
            in_specs=[
                pl.BlockSpec((TM, 2 * hid), lambda i: (i, 0)),
                pl.BlockSpec((hid, N), lambda i: (0, 0)),
            ],
            out_specs=pl.BlockSpec((TM, N), lambda i: (i, 0)),
        ),
        compiler_params=pltpu.CompilerParams(
            dimension_semantics=("parallel",),
            vmem_limit_bytes=VMEM_LIMIT,
        ),
    )(yb, w.astype(jnp.bfloat16))
    return out if M_pad == M else out[:M]


# ---------------------------------------------------------------------------
# Pallas kernel 4: depthwise 3x3 conv (groups == channels), row-block tiled
# ---------------------------------------------------------------------------
def _dwconv3x3_kernel(x_ref, w_ref, o_ref, *, rb):
    # x_ref: (1, H+2, W+2, C) bf16 full padded plane (block index only depends
    #        on the batch axis, so it stays resident across the row axis).
    # o_ref: (1, rb, W, C) -- row-block f32 accumulator stays in a few vregs.
    r = pl.program_id(1)
    Wd = o_ref.shape[2]
    row0 = r * rb
    acc = jnp.zeros(o_ref.shape[1:], jnp.float32)
    for ky in range(3):
        for kx in range(3):
            tap = x_ref[0, pl.ds(row0 + ky, rb), pl.ds(kx, Wd), :]
            acc = acc + tap.astype(jnp.float32) * w_ref[ky, kx, :].astype(jnp.float32)
    o_ref[0] = acc.astype(o_ref.dtype)


def dwconv3x3_pallas(x_nhwc, w_c133):
    """Depthwise 3x3 conv, stride 1, pad 1 (PyTorch weight (C,1,3,3)).
    bf16 ingest/output, f32 MAC (v5e-safe), row-block grid avoids spills."""
    B, H, W, C = x_nhwc.shape
    if H % 4 == 0:
        RB = 4
    elif H % 2 == 0:
        RB = 2
    else:
        RB = H
    xp = jnp.pad(x_nhwc.astype(jnp.bfloat16), ((0, 0), (1, 1), (1, 1), (0, 0)))
    w = jnp.transpose(w_c133[:, 0, :, :], (1, 2, 0)).astype(jnp.bfloat16)  # (3,3,C)
    return pl.pallas_call(
        functools.partial(_dwconv3x3_kernel, rb=RB),
        out_shape=jax.ShapeDtypeStruct((B, H, W, C), jnp.bfloat16),
        grid_spec=pltpu.PrefetchScalarGridSpec(
            num_scalar_prefetch=0,
            grid=(B, H // RB),
            in_specs=[
                pl.BlockSpec((1, H + 2, W + 2, C), lambda b, r: (b, 0, 0, 0)),
                pl.BlockSpec((3, 3, C), lambda b, r: (0, 0, 0)),
            ],
            out_specs=pl.BlockSpec((1, RB, W, C), lambda b, r: (b, r, 0, 0)),
        ),
        compiler_params=pltpu.CompilerParams(
            dimension_semantics=("parallel", "arbitrary"),
            vmem_limit_bytes=VMEM_LIMIT,
        ),
    )(xp, w)


# ---------------------------------------------------------------------------
# Pallas kernel 5: MDTA channel-attention core (all heads per batch element)
# ---------------------------------------------------------------------------
def _mdta_attn_kernel(t_ref, qkv_ref, o_ref, *, heads):
    # t_ref: (heads,) f32 in SMEM | qkv_ref: (1, L, 3C) bf16 | o_ref: (1, L, C)
    C = o_ref.shape[-1]
    d = C // heads
    outs = []
    for h in range(heads):
        q = qkv_ref[0, :, h * d:(h + 1) * d].astype(jnp.float32)
        k = qkv_ref[0, :, C + h * d:C + (h + 1) * d].astype(jnp.float32)
        v = qkv_ref[0, :, 2 * C + h * d:2 * C + (h + 1) * d]
        # F.normalize(dim=-1) in the PyTorch (head, channel, L) layout
        # == per-channel L2 normalisation over the spatial axis (axis 0 here).
        qn = q * lax.rsqrt(jnp.maximum(jnp.sum(q * q, axis=0, keepdims=True), 1e-24))
        kn = k * lax.rsqrt(jnp.maximum(jnp.sum(k * k, axis=0, keepdims=True), 1e-24))
        # channel-attention scores (d, d); bf16 MXU feed, f32 accumulation.
        s = lax.dot_general(qn.astype(jnp.bfloat16), kn.astype(jnp.bfloat16),
                            (((0,), (0,)), ((), ())),
                            preferred_element_type=jnp.float32)
        s = s * t_ref[h]
        s = s - jnp.max(s, axis=-1, keepdims=True)
        e = jnp.exp(s)
        attn = e * pl.reciprocal(jnp.sum(e, axis=-1, keepdims=True), approx=True)
        # out[l, i] = sum_j v[l, j] * attn[i, j]   (stays in (L, d) layout)
        out = lax.dot_general(v, attn.astype(jnp.bfloat16),
                              (((1,), (1,)), ((), ())),
                              preferred_element_type=jnp.float32)
        outs.append(out.astype(o_ref.dtype))
    o_ref[0] = jnp.concatenate(outs, axis=-1) if heads > 1 else outs[0]


def mdta_attention_pallas(qkv_bld, temperature, heads):
    """MDTA channel attention.  qkv: (B, L, 3C) in the natural channels-last
    layout (no wrapper transposes); all heads of one batch element are handled
    per grid step with q/k L2-norm + temperature + softmax fused in-kernel."""
    B, L, C3 = qkv_bld.shape
    C = C3 // 3
    return pl.pallas_call(
        functools.partial(_mdta_attn_kernel, heads=heads),
        out_shape=jax.ShapeDtypeStruct((B, L, C), jnp.bfloat16),
        grid_spec=pltpu.PrefetchScalarGridSpec(
            num_scalar_prefetch=0,
            grid=(B,),
            in_specs=[
                pl.BlockSpec(memory_space=pltpu.MemorySpace.SMEM),
                pl.BlockSpec((1, L, C3), lambda b: (b, 0, 0)),
            ],
            out_specs=pl.BlockSpec((1, L, C), lambda b: (b, 0, 0)),
        ),
        compiler_params=pltpu.CompilerParams(
            dimension_semantics=("parallel",),
            vmem_limit_bytes=VMEM_LIMIT,
        ),
    )(temperature.astype(jnp.float32), qkv_bld.astype(jnp.bfloat16))


# ---------------------------------------------------------------------------
# XLA-side glue (layout only)
# ---------------------------------------------------------------------------
def pixel_unshuffle_nhwc(x, r=2):
    B, H, W, C = x.shape
    x = x.reshape(B, H // r, r, W // r, r, C)
    x = jnp.transpose(x, (0, 1, 3, 5, 2, 4))
    return x.reshape(B, H // r, W // r, C * r * r)


def pixel_shuffle_nhwc(x, r=2):
    B, H, W, C = x.shape
    Co = C // (r * r)
    x = x.reshape(B, H, W, Co, r, r)
    x = jnp.transpose(x, (0, 1, 4, 2, 5, 3))
    return x.reshape(B, H * r, W * r, Co)


# ---------------------------------------------------------------------------
# Restormer building blocks
# ---------------------------------------------------------------------------
def transformer_block(p, x, heads):
    B, H, W, C = x.shape
    L = H * W
    hid = int(C * EXPANSION)

    # ----------------------------- MDTA --------------------------------
    qkv_w = jnp.transpose(p['qkv_w'].reshape(3 * C, C), (1, 0))            # (C, 3C)
    qkv = ln_matmul_pallas(x.reshape(B * L, C), p['norm1_w'], p['norm1_b'], qkv_w)
    qkv = dwconv3x3_pallas(qkv.reshape(B, H, W, 3 * C), p['qkv_dw_w'])     # bf16
    att = mdta_attention_pallas(qkv.reshape(B, L, 3 * C), p['temperature'], heads)
    x = x + conv1x1_pallas(att.reshape(B, H, W, C), p['attn_proj_w'])

    # ----------------------------- GDFN --------------------------------
    fin_w = jnp.transpose(p['ffn_in_w'].reshape(2 * hid, C), (1, 0))       # (C, 2h)
    y = ln_matmul_pallas(x.reshape(B * L, C), p['norm2_w'], p['norm2_b'], fin_w)
    y = dwconv3x3_pallas(y.reshape(B, H, W, 2 * hid), p['ffn_dw_w'])       # bf16
    fout_w = jnp.transpose(p['ffn_out_w'].reshape(C, hid), (1, 0))         # (h, C)
    x = x + gate_matmul_pallas(y.reshape(B * L, 2 * hid), fout_w).reshape(B, H, W, C)
    return x


def run_blocks(stack, x, heads):
    def body(carry, blk):
        return transformer_block(blk, carry, heads), None
    y, _ = lax.scan(body, x, stack)
    return y


# ---------------------------------------------------------------------------
# Parameters
# ---------------------------------------------------------------------------
def _conv_w(key, shape):
    fan_in = shape[-3] * shape[-2] * shape[-1]
    return jax.random.normal(key, shape, jnp.float32) * (fan_in ** -0.5)


def init_block_stack(key, n, C, heads):
    h = int(C * EXPANSION)
    ks = jax.random.split(key, 6)
    return {
        'norm1_w': jnp.ones((n, C), jnp.float32),
        'norm1_b': jnp.zeros((n, C), jnp.float32),
        'temperature': jnp.ones((n, heads), jnp.float32),
        'qkv_w': _conv_w(ks[0], (n, 3 * C, C, 1, 1)),
        'qkv_dw_w': _conv_w(ks[1], (n, 3 * C, 1, 3, 3)),
        'attn_proj_w': _conv_w(ks[2], (n, C, C, 1, 1)),
        'norm2_w': jnp.ones((n, C), jnp.float32),
        'norm2_b': jnp.zeros((n, C), jnp.float32),
        'ffn_in_w': _conv_w(ks[3], (n, 2 * h, C, 1, 1)),
        'ffn_dw_w': _conv_w(ks[4], (n, 2 * h, 1, 3, 3)),
        'ffn_out_w': _conv_w(ks[5], (n, C, h, 1, 1)),
    }


def init_params(key):
    ks = iter(jax.random.split(key, 20))
    p = {}
    p['embed'] = _conv_w(next(ks), (CHANNELS[0], IN_CHANS, 3, 3))
    p['encoders'] = [
        init_block_stack(next(ks), NUM_BLOCKS[l], CHANNELS[l], NUM_HEADS[l])
        for l in range(4)
    ]
    p['downs'] = [
        _conv_w(next(ks), (CHANNELS[l] // 2, CHANNELS[l], 3, 3))
        for l in range(3)
    ]
    p['ups'] = [
        _conv_w(next(ks), (c * 2, c, 3, 3))
        for c in (CHANNELS[3], CHANNELS[2], CHANNELS[1])
    ]
    p['reduces'] = [
        _conv_w(next(ks), (CHANNELS[2], CHANNELS[3], 1, 1)),
        _conv_w(next(ks), (CHANNELS[1], CHANNELS[2], 1, 1)),
    ]
    p['decoders'] = [
        init_block_stack(next(ks), NUM_BLOCKS[2], CHANNELS[2], NUM_HEADS[2]),
        init_block_stack(next(ks), NUM_BLOCKS[1], CHANNELS[1], NUM_HEADS[1]),
        init_block_stack(next(ks), NUM_BLOCKS[0], CHANNELS[1], NUM_HEADS[0]),
    ]
    return p


# ---------------------------------------------------------------------------
# Full forward (matches Restormer_FDKN.forward)
# ---------------------------------------------------------------------------
def restormer_fdkn_forward(params, x_nchw):
    x = jnp.transpose(x_nchw, (0, 2, 3, 1))                    # NCHW -> NHWC
    fo = conv3x3_pallas(x, params['embed'])
    e1 = run_blocks(params['encoders'][0], fo, NUM_HEADS[0])
    e2 = run_blocks(
        params['encoders'][1],
        pixel_unshuffle_nhwc(conv3x3_pallas(e1, params['downs'][0])),
        NUM_HEADS[1])
    e3 = run_blocks(
        params['encoders'][2],
        pixel_unshuffle_nhwc(conv3x3_pallas(e2, params['downs'][1])),
        NUM_HEADS[2])
    e4 = run_blocks(
        params['encoders'][3],
        pixel_unshuffle_nhwc(conv3x3_pallas(e3, params['downs'][2])),
        NUM_HEADS[3])

    u3 = pixel_shuffle_nhwc(conv3x3_pallas(e4, params['ups'][0]))
    d3 = run_blocks(
        params['decoders'][0],
        conv1x1_pallas(jnp.concatenate([u3, e3], axis=-1), params['reduces'][0]),
        NUM_HEADS[2])
    u2 = pixel_shuffle_nhwc(conv3x3_pallas(d3, params['ups'][1]))
    d2 = run_blocks(
        params['decoders'][1],
        conv1x1_pallas(jnp.concatenate([u2, e2], axis=-1), params['reduces'][1]),
        NUM_HEADS[1])
    u1 = pixel_shuffle_nhwc(conv3x3_pallas(d2, params['ups'][2]))
    fd = run_blocks(
        params['decoders'][2],
        jnp.concatenate([u1, e1], axis=-1),
        NUM_HEADS[0])
    # `refinement` and `output` modules are not used by the reference forward().
    return jnp.transpose(fd, (0, 3, 1, 2))                     # NHWC -> NCHW


# ---------------------------------------------------------------------------
# Numerical self-checks of every kernel vs XLA references
# ---------------------------------------------------------------------------
def _mdta_reference(qkv, temp, heads):
    B, L, C3 = qkv.shape
    C = C3 // 3
    d = C // heads
    q = qkv[..., :C].reshape(B, L, heads, d)
    k = qkv[..., C:2 * C].reshape(B, L, heads, d)
    v = qkv[..., 2 * C:].reshape(B, L, heads, d)

    def nrm(t):  # normalize over the spatial axis (PyTorch dim=-1 after reshape)
        n = jnp.sqrt(jnp.sum(t * t, axis=1, keepdims=True))
        return t / jnp.maximum(n, 1e-12)

    qn, kn = nrm(q), nrm(k)
    s = jnp.einsum('blhi,blhj->bhij', qn, kn) * temp.reshape(1, heads, 1, 1)
    attn = jax.nn.softmax(s, axis=-1)
    out = jnp.einsum('bhij,blhj->blhi', attn, v)
    return out.reshape(B, L, C)


def _self_test():
    keys = jax.random.split(jax.random.PRNGKey(123), 8)

    # --- dense 3x3 conv (bf16 im2col + MXU matmul) ---
    x = jax.random.normal(keys[0], (2, 8, 8, 16), jnp.float32)
    w = jax.random.normal(keys[1], (24, 16, 3, 3), jnp.float32) * 0.1
    xq = x.astype(jnp.bfloat16).astype(jnp.float32)
    wq = w.astype(jnp.bfloat16).astype(jnp.float32)
    ref = lax.conv_general_dilated(
        xq, jnp.transpose(wq, (2, 3, 1, 0)), (1, 1), 'SAME',
        dimension_numbers=('NHWC', 'HWIO', 'NHWC'))
    got = conv3x3_pallas(x, w)
    assert float(jnp.max(jnp.abs(got - ref))) < 3e-2, "conv3x3 mismatch"

    # --- depthwise 3x3 conv (row-block tiled) ---
    wd = jax.random.normal(keys[2], (16, 1, 3, 3), jnp.float32) * 0.1
    wdq = wd.astype(jnp.bfloat16).astype(jnp.float32)
    refd = lax.conv_general_dilated(
        xq, jnp.transpose(wdq, (2, 3, 1, 0)), (1, 1), 'SAME',
        dimension_numbers=('NHWC', 'HWIO', 'NHWC'), feature_group_count=16)
    gotd = dwconv3x3_pallas(x, wd).astype(jnp.float32)
    assert float(jnp.max(jnp.abs(gotd - refd))) < 3e-2, "dwconv3x3 mismatch"

    # --- fused LayerNorm + matmul ---
    C, N, M = 48, 64, 64
    xl = jax.random.normal(keys[3], (M, C), jnp.float32)
    g = jax.random.normal(keys[4], (C,), jnp.float32) * 0.2 + 1.0
    b = jax.random.normal(keys[5], (C,), jnp.float32) * 0.1
    wl = jax.random.normal(keys[6], (C, N), jnp.float32) * 0.1
    mu = jnp.mean(xl, -1, keepdims=True)
    var = jnp.mean((xl - mu) ** 2, -1, keepdims=True)
    ln = (xl - mu) / jnp.sqrt(var + 1e-5) * g + b
    ref_lm = ln @ wl
    got_lm = ln_matmul_pallas(xl, g, b, wl).astype(jnp.float32)
    assert float(jnp.max(jnp.abs(got_lm - ref_lm))) < 1e-1, "ln_matmul mismatch"

    # --- fused GELU-gate + matmul ---
    hid = 40
    yg = jax.random.normal(keys[7], (M, 2 * hid), jnp.float32)
    wg = jax.random.normal(keys[0], (hid, N), jnp.float32) * 0.1
    yq = yg.astype(jnp.bfloat16).astype(jnp.float32)
    gref = jax.nn.gelu(yq[:, :hid], approximate=False) * yq[:, hid:]
    ref_g = gref @ wg.astype(jnp.bfloat16).astype(jnp.float32)
    got_g = gate_matmul_pallas(yg, wg)
    assert float(jnp.max(jnp.abs(got_g - ref_g))) < 1e-1, "gate_matmul mismatch"

    # --- MDTA attention core ---
    B, L, Ca, heads = 2, 16, 48, 2
    qkv = jax.random.normal(keys[1], (B, L, 3 * Ca), jnp.float32)
    temp = jnp.array([1.3, 0.7], jnp.float32)
    qkvq = qkv.astype(jnp.bfloat16).astype(jnp.float32)
    ref_a = _mdta_reference(qkvq, temp, heads)
    got_a = mdta_attention_pallas(qkv, temp, heads).astype(jnp.float32)
    assert float(jnp.max(jnp.abs(got_a - ref_a))) < 1e-1, "attention mismatch"


if __name__ == "__main__":
    _self_test()

    key = jax.random.PRNGKey(0)
    kp, kx = jax.random.split(key)
    params = init_params(kp)
    x = jax.random.normal(kx, (2, IN_CHANS, 16, 16), jnp.float32)

    fwd = jax.jit(restormer_fdkn_forward)
    out = fwd(params, x)
    jax.block_until_ready(out)

    assert out.shape == (2, CHANNELS[1], 16, 16), out.shape
    assert bool(jnp.all(jnp.isfinite(out))), "non-finite values in output"
    print("KERNEL_OK")
</pallas_src>

<mosaic_0001>
module attributes {stable_mosaic.version = 11 : i64} {
  func.func @_matmul_kernel(%arg0: i32, %arg1: i32, %arg2: memref<128x144xbf16, #tpu.memory_space<vmem>>, %arg3: memref<144x24xbf16, #tpu.memory_space<vmem>>, %arg4: memref<128x24xf32, #tpu.memory_space<vmem>>) attributes {dimension_semantics = [#tpu.dimension_semantics<parallel>, #tpu.dimension_semantics<parallel>], iteration_bounds = array<i64: 1, 1>, scalar_prefetch = 0 : i64, scratch_operands = 0 : i64, tpu.core_type = #tpu.core_type<tc>, window_params = [{transform_indices = @transform_0, window_bounds = array<i64: 128, 144>}, {transform_indices = @transform_1, window_bounds = array<i64: 144, 24>}, {transform_indices = @transform_2, window_bounds = array<i64: 128, 24>}]} {
    %c0 = arith.constant 0 : index
    %c0_0 = arith.constant 0 : index
    %0 = vector.load %arg2[%c0, %c0_0] : memref<128x144xbf16, #tpu.memory_space<vmem>>, vector<128x144xbf16>
    %c0_1 = arith.constant 0 : index
    %c0_2 = arith.constant 0 : index
    %1 = vector.load %arg3[%c0_1, %c0_2] : memref<144x24xbf16, #tpu.memory_space<vmem>>, vector<144x24xbf16>
    %cst = arith.constant dense<0.000000e+00> : vector<128x24xf32>
    %2 = tpu.matmul %0, %1, %cst {dimension_numbers = #tpu.dot_dimension_numbers<[1], [0], [0], [1], [0, 0, 1, 1], [], []>} : vector<128x144xbf16>, vector<144x24xbf16>, vector<128x24xf32> -> vector<128x24xf32>
    %c0_3 = arith.constant 0 : index
    %c0_4 = arith.constant 0 : index
    %3 = vector.load %arg4[%c0_3, %c0_4] : memref<128x24xf32, #tpu.memory_space<vmem>>, vector<128x24xf32>
    tpu.vector_store %arg4[%c0_3, %c0_4], %2 {strides = array<i32>} : memref<128x24xf32, #tpu.memory_space<vmem>>, vector<128x24xf32>,
    return
  }
  func.func @transform_0(%arg0: i32, %arg1: i32) -> (i32, i32) {
    %c0_i32 = arith.constant 0 : i32
    %c0_i32_0 = arith.constant 0 : i32
    return %arg0, %c0_i32 : i32, i32
  }
  func.func @transform_1(%arg0: i32, %arg1: i32) -> (i32, i32) {
    %c0_i32 = arith.constant 0 : i32
    %c0_i32_0 = arith.constant 0 : i32
    return %c0_i32, %arg1 : i32, i32
  }
  func.func @transform_2(%arg0: i32, %arg1: i32) -> (i32, i32) {
    %c0_i32 = arith.constant 0 : i32
    return %arg0, %arg1 : i32, i32
  }
}

</mosaic_0001>

<llo_original>
// kernel: tpu_custom_call.1
$region0: #{tpu_custom_call.1}
  #allocation0 [shape = 'u32[]', space=smem, size = 0x4, offset = 0x4, fixed_abs, tag = 'smem constant byte address 0x4 - core index']
  #allocation1 [shape = 'u32[144,128]{1,0:T(1,128)}', space=vmem, size = 0x12000, scoped, tag = 'internal scratch']
  %s0 = inlined_call_operand.vmem [shape: bf16[128,144], index: 0, kind: input, shape index: {}]
  %s1 = inlined_call_operand.vmem [shape: bf16[144,24], index: 1, kind: input, shape index: {}]
  %s2 = inlined_call_operand.vmem [shape: f32[128,24], index: 2, kind: output, shape index: {}]
  %s3 = sld [smem:[#allocation0]]
  $region18: #{tpu_custom_call.1} parent=0
    _
  %s5 = ssub.s32 1, %s3
  %s6 = scalar_select 0, %s5, %s3
  // Predicated region
  $region2: #{tpu_custom_call.1} parent=0 // pred_check
    _
  $region3: #{tpu_custom_call.1} parent=0 // pred_check_branch
    %8 = sbr.rel (0) target = $region5
  $region4: #{tpu_custom_call.1} parent=0 // pred_region
    _
  $region5: #{tpu_custom_call.1} parent=0 // pred_fallthru
    _
  // Predicated region
  $region6: #{tpu_custom_call.1} parent=0 // pred_check
    _
  $region7: #{tpu_custom_call.1} parent=0 // pred_check_branch
    %10 = sbr.rel (0) target = $region9
  $region8: #{tpu_custom_call.1} parent=0 // pred_region
    _
  $region9: #{tpu_custom_call.1} parent=0 // pred_fallthru
    _
  %v12 = vld [vmem:[%s0] sm:$0xff]
  %v13 = vld [vmem:[%s0 + $0x8] sm:$0xff]
  %v14 = vld [vmem:[%s0 + $0x10] sm:$0xff]
  %v15 = vld [vmem:[%s0 + $0x18] sm:$0xff]
  %v16 = vld [vmem:[%s0 + $0x20] sm:$0xff]
  %v17 = vld [vmem:[%s0 + $0x28] sm:$0xff]
  %v18 = vld [vmem:[%s0 + $0x30] sm:$0xff]
  %v19 = vld [vmem:[%s0 + $0x38] sm:$0xff]
  %v20 = vld [vmem:[%s0 + $0x40] sm:$0xff]
  %v21 = vld [vmem:[%s0 + $0x48] sm:$0xff]
  %v22 = vld [vmem:[%s0 + $0x50] sm:$0xff]
  %v23 = vld [vmem:[%s0 + $0x58] sm:$0xff]
  %v24 = vld [vmem:[%s0 + $0x60] sm:$0xff]
  %v25 = vld [vmem:[%s0 + $0x68] sm:$0xff]
  %v26 = vld [vmem:[%s0 + $0x70] sm:$0xff]
  %v27 = vld [vmem:[%s0 + $0x78] sm:$0xff]
  %v28 = vld [vmem:[%s1] sm:$0xf]
  %v29 = vld [vmem:[%s1 + $0x4] sm:$0xf]
  %v30 = vld [vmem:[%s1 + $0x8] sm:$0xf]
  %v31 = vld [vmem:[%s1 + $0xc] sm:$0xf]
  %v32 = vld [vmem:[%s1 + $0x10] sm:$0xf]
  %v33 = vld [vmem:[%s1 + $0x14] sm:$0xf]
  %v34 = vld [vmem:[%s1 + $0x18] sm:$0xf]
  %v35 = vld [vmem:[%s1 + $0x1c] sm:$0xf]
  %v36 = vld [vmem:[%s1 + $0x20] sm:$0xf]
  %v37 = vld [vmem:[%s1 + $0x24] sm:$0xf]
  %v38 = vld [vmem:[%s1 + $0x28] sm:$0xf]
  %v39 = vld [vmem:[%s1 + $0x2c] sm:$0xf]
  %v40 = vld [vmem:[%s1 + $0x30] sm:$0xf]
  %v41 = vld [vmem:[%s1 + $0x34] sm:$0xf]
  %v42 = vld [vmem:[%s1 + $0x38] sm:$0xf]
  %v43 = vld [vmem:[%s1 + $0x3c] sm:$0xf]
  %v44 = vld [vmem:[%s1 + $0x40] sm:$0xf]
  %v45 = vld [vmem:[%s1 + $0x44] sm:$0xf]
  %v62 = vunpack.c.l.b16 %v12
  %v63 = vunpack.c.h.b16 %v12
  %v64 = vunpack.c.l.b16 %v13
  %v65 = vunpack.c.h.b16 %v13
  %v66 = vunpack.c.l.b16 %v14
  %v67 = vunpack.c.h.b16 %v14
  %v68 = vunpack.c.l.b16 %v15
  %v69 = vunpack.c.h.b16 %v15
  %v70 = vunpack.c.l.b16 %v16
  %v71 = vunpack.c.h.b16 %v16
  %v72 = vunpack.c.l.b16 %v17
  %v73 = vunpack.c.h.b16 %v17
  %v74 = vunpack.c.l.b16 %v18
  %v75 = vunpack.c.h.b16 %v18
  %v76 = vunpack.c.l.b16 %v19
  %v77 = vunpack.c.h.b16 %v19
  %v78 = vunpack.c.l.b16 %v20
  %v79 = vunpack.c.h.b16 %v20
  %v80 = vunpack.c.l.b16 %v21
  %v81 = vunpack.c.h.b16 %v21
  %v82 = vunpack.c.l.b16 %v22
  %v83 = vunpack.c.h.b16 %v22
  %v84 = vunpack.c.l.b16 %v23
  %v85 = vunpack.c.h.b16 %v23
  %v86 = vunpack.c.l.b16 %v24
  %v87 = vunpack.c.h.b16 %v24
  %v88 = vunpack.c.l.b16 %v25
  %v89 = vunpack.c.h.b16 %v25
  %v90 = vunpack.c.l.b16 %v26
  %v91 = vunpack.c.h.b16 %v26
  %v92 = vunpack.c.l.b16 %v27
  %v93 = vunpack.c.h.b16 %v27
  %v94 = vpack.c.b16 %v64, %v62
  %v95 = vpack.c.b16 %v65, %v63
  %v96 = vpack.c.b16 %v68, %v66
  %v97 = vpack.c.b16 %v69, %v67
  %v98 = vpack.c.b16 %v72, %v70
  %v99 = vpack.c.b16 %v73, %v71
  %v100 = vpack.c.b16 %v76, %v74
  %v101 = vpack.c.b16 %v77, %v75
  %v102 = vpack.c.b16 %v80, %v78
  %v103 = vpack.c.b16 %v81, %v79
  %v104 = vpack.c.b16 %v84, %v82
  %v105 = vpack.c.b16 %v85, %v83
  %v106 = vpack.c.b16 %v88, %v86
  %v107 = vpack.c.b16 %v89, %v87
  %v108 = vpack.c.b16 %v92, %v90
  %v109 = vpack.c.b16 %v93, %v91
  %v136 = vunpack.c.l.b16 %v28
  %v137 = vunpack.c.l.b16 %v29
  %v138 = vunpack.c.l.b16 %v30
  %v139 = vunpack.c.l.b16 %v31
  %v140 = vunpack.c.l.b16 %v32
  %v141 = vunpack.c.l.b16 %v33
  %v142 = vunpack.c.l.b16 %v34
  %v143 = vunpack.c.l.b16 %v35
  %v144 = vunpack.c.l.b16 %v36
  %v145 = vunpack.c.l.b16 %v37
  %v146 = vunpack.c.l.b16 %v38
  %v147 = vunpack.c.l.b16 %v39
  %v148 = vunpack.c.l.b16 %v40
  %v149 = vunpack.c.l.b16 %v41
  %v150 = vunpack.c.l.b16 %v42
  %v151 = vunpack.c.l.b16 %v43
  %v152 = vunpack.c.l.b16 %v44
  %v153 = vunpack.c.l.b16 %v45
  %v154 = vpack.c.b16 %v137, %v136
  %v155 = vpack.c.b16 %v139, %v138
  %v156 = vpack.c.b16 %v141, %v140
  %v157 = vpack.c.b16 %v143, %v142
  %v158 = vpack.c.b16 %v145, %v144
  %v159 = vpack.c.b16 %v147, %v146
  %v160 = vpack.c.b16 %v149, %v148
  %v161 = vpack.c.b16 %v151, %v150
  %v162 = vpack.c.b16 %v153, %v152
  %vm172 = vcmask 130048
  %v174 = vsel %vm172, %v95, 0
  %v177 = vsel %vm172, %v97, 0
  %v180 = vsel %vm172, %v99, 0
  %v183 = vsel %vm172, %v101, 0
  %v186 = vsel %vm172, %v103, 0
  %v189 = vsel %vm172, %v105, 0
  %v192 = vsel %vm172, %v107, 0
  %v195 = vsel %vm172, %v109, 0
  %197 = vmatprep.subr.bf16.mxu0 0
  %198 = vmatpush1.bf16.msra.mxu0 %v161
  %199 = vmatprep.subr.bf16.mxu0 0
  %200 = vmatpush1.bf16.msra.mxu0 %v160
  %201 = vmatprep.subr.bf16.mxu0 0
  %202 = vmatpush1.bf16.msra.mxu0 %v159
  %203 = vmatprep.subr.bf16.mxu0 0
  %204 = vmatpush1.bf16.msra.mxu0 %v158
  %205 = vmatprep.subr.bf16.mxu0 0
  %206 = vmatpush1.bf16.msra.mxu0 %v157
  %207 = vmatprep.subr.bf16.mxu0 0
  %208 = vmatpush1.bf16.msra.mxu0 %v156
  %209 = vmatprep.subr.bf16.mxu0 0
  %210 = vmatpush1.bf16.msra.mxu0 %v155
  %211 = vmatprep.subr.bf16.mxu0 0
  %212 = vmatpush1.bf16.msra.mxu0 %v154
  %213 = vmatprep.subr.bf16.mxu0 0
  %214 = vmatpush2.bf16.msra.mxu0 0
  %215 = vmatprep.subr.bf16.mxu0 0
  %216 = vmatpush2.bf16.msra.mxu0 0
  %217 = vmatprep.subr.bf16.mxu0 0
  %218 = vmatpush2.bf16.msra.mxu0 0
  %219 = vmatprep.subr.bf16.mxu0 0
  %220 = vmatpush2.bf16.msra.mxu0 0
  %221 = vmatprep.subr.bf16.mxu0 0
  %222 = vmatpush2.bf16.msra.mxu0 0
  %223 = vmatprep.subr.bf16.mxu0 0
  %224 = vmatpush2.bf16.msra.mxu0 0
  %225 = vmatprep.subr.bf16.mxu0 0
  %226 = vmatpush2.bf16.msra.mxu0 0
  %227 = vmatprep.subr.bf16.mxu0 0
  %228 = vmatpush2.bf16.msra.mxu0 %v162
  %229 = vmatprep.mubr.bf16.mxu0 %v174
  %230 = vmatmul.mubr.bf16.gmra.mxu0 %v94
  %v231 = vpop.f32.mrf.mxu0
  %v232 = vadd.f32 0.0, %v231
  %v233 = vpop.f32.mrf.mxu0
  %v234 = vpop.f32.mrf.mxu0
  %v235 = vadd.f32 0.0, %v234
  %v236 = vpop.f32.mrf.mxu0
  %237 = vmatprep.mubr.bf16.mxu0 %v177
  %238 = vmatmul.mubr.bf16.gmra.mxu0 %v96
  %v239 = vpop.f32.mrf.mxu0
  %v240 = vadd.f32 0.0, %v239
  %v241 = vpop.f32.mrf.mxu0
  %v242 = vpop.f32.mrf.mxu0
  %v243 = vadd.f32 0.0, %v242
  %v244 = vpop.f32.mrf.mxu0
  %245 = vmatprep.mubr.bf16.mxu0 %v180
  %246 = vmatmul.mubr.bf16.gmra.mxu0 %v98
  %v247 = vpop.f32.mrf.mxu0
  %v248 = vadd.f32 0.0, %v247
  %v249 = vpop.f32.mrf.mxu0
  %v250 = vpop.f32.mrf.mxu0
  %v251 = vadd.f32 0.0, %v250
  %v252 = vpop.f32.mrf.mxu0
  %253 = vmatprep.mubr.bf16.mxu0 %v183
  %254 = vmatmul.mubr.bf16.gmra.mxu0 %v100
  %v255 = vpop.f32.mrf.mxu0
  %v256 = vadd.f32 0.0, %v255
  %v257 = vpop.f32.mrf.mxu0
  %v258 = vpop.f32.mrf.mxu0
  %v259 = vadd.f32 0.0, %v258
  %v260 = vpop.f32.mrf.mxu0
  %261 = vmatprep.mubr.bf16.mxu0 %v186
  %262 = vmatmul.mubr.bf16.gmra.mxu0 %v102
  %v263 = vpop.f32.mrf.mxu0
  %v264 = vadd.f32 0.0, %v263
  %v265 = vpop.f32.mrf.mxu0
  %v266 = vpop.f32.mrf.mxu0
  %v267 = vadd.f32 0.0, %v266
  %v268 = vpop.f32.mrf.mxu0
  %269 = vmatprep.mubr.bf16.mxu0 %v189
  %270 = vmatmul.mubr.bf16.gmra.mxu0 %v104
  %v271 = vpop.f32.mrf.mxu0
  %v272 = vadd.f32 0.0, %v271
  %v273 = vpop.f32.mrf.mxu0
  %v274 = vpop.f32.mrf.mxu0
  %v275 = vadd.f32 0.0, %v274
  %v276 = vpop.f32.mrf.mxu0
  %277 = vmatprep.mubr.bf16.mxu0 %v192
  %278 = vmatmul.mubr.bf16.gmra.mxu0 %v106
  %v279 = vpop.f32.mrf.mxu0
  %v280 = vadd.f32 0.0, %v279
  %v281 = vpop.f32.mrf.mxu0
  %v282 = vpop.f32.mrf.mxu0
  %v283 = vadd.f32 0.0, %v282
  %v284 = vpop.f32.mrf.mxu0
  %285 = vmatprep.mubr.bf16.mxu0 %v195
  %286 = vmatmul.mubr.bf16.gmra.mxu0 %v108
  %v287 = vpop.f32.mrf.mxu0
  %v288 = vadd.f32 0.0, %v287
  %v289 = vpop.f32.mrf.mxu0
  %v290 = vpop.f32.mrf.mxu0
  %v291 = vadd.f32 0.0, %v290
  %v292 = vpop.f32.mrf.mxu0
  %293 = vdwg.mxu0
  %vm294 = vcmask 195584
  %295 = vst.msk [vmem:[%s2] sm:$0xff] %vm294, %v232
  %296 = vst.msk [vmem:[%s2 + $0x8] sm:$0xff] %vm294, %v235
  %297 = vst.msk [vmem:[%s2 + $0x10] sm:$0xff] %vm294, %v240
  %298 = vst.msk [vmem:[%s2 + $0x18] sm:$0xff] %vm294, %v243
  %299 = vst.msk [vmem:[%s2 + $0x20] sm:$0xff] %vm294, %v248
  %300 = vst.msk [vmem:[%s2 + $0x28] sm:$0xff] %vm294, %v251
  %301 = vst.msk [vmem:[%s2 + $0x30] sm:$0xff] %vm294, %v256
  %302 = vst.msk [vmem:[%s2 + $0x38] sm:$0xff] %vm294, %v259
  %303 = vst.msk [vmem:[%s2 + $0x40] sm:$0xff] %vm294, %v264
  %304 = vst.msk [vmem:[%s2 + $0x48] sm:$0xff] %vm294, %v267
  %305 = vst.msk [vmem:[%s2 + $0x50] sm:$0xff] %vm294, %v272
  %306 = vst.msk [vmem:[%s2 + $0x58] sm:$0xff] %vm294, %v275
  %307 = vst.msk [vmem:[%s2 + $0x60] sm:$0xff] %vm294, %v280
  %308 = vst.msk [vmem:[%s2 + $0x68] sm:$0xff] %vm294, %v283
  %309 = vst.msk [vmem:[%s2 + $0x70] sm:$0xff] %vm294, %v288
  %310 = vst.msk [vmem:[%s2 + $0x78] sm:$0xff] %vm294, %v291
  // Predicated region
  $region10: #{tpu_custom_call.1} parent=0 // pred_check
    _
  $region11: #{tpu_custom_call.1} parent=0 // pred_check_branch
    %312 = sbr.rel (0) target = $region13
  $region12: #{tpu_custom_call.1} parent=0 // pred_region
    _
  $region13: #{tpu_custom_call.1} parent=0 // pred_fallthru
    _
  // Predicated region
  $region14: #{tpu_custom_call.1} parent=0 // pred_check
    _
  $region15: #{tpu_custom_call.1} parent=0 // pred_check_branch
    %314 = sbr.rel (0) target = $region17
  $region16: #{tpu_custom_call.1} parent=0 // pred_region
    _
  $region17: #{tpu_custom_call.1} parent=0 // pred_fallthru
    _

</llo_original>
